<compile_context>
chip_gen: v6e
topology: v6e:2x2x1
jax: 0.10.0
libtpu: 0.0.40
codegen_flags: <defaults>
</compile_context>

<pallas_src>
import functools

import jax
import jax.numpy as jnp
from jax.experimental import pallas as pl
from jax.experimental.pallas import tpu as pltpu

LANE = 128


def _round_up(x, m):
    return (x + m - 1) // m * m


# ----------------------------------------------------------------------------
# Kernel 1: fused node-wise pre-transform  Z = H @ [W_self | W_neigh] + [b | 0]
# ----------------------------------------------------------------------------
def _pretransform_kernel(h_ref, w_ref, b_ref, z_ref):
    acc = jnp.dot(h_ref[...], w_ref[...], preferred_element_type=jnp.float32)
    z_ref[...] = (acc + b_ref[...]).astype(z_ref.dtype)


def sage_pretransform(h, w_cat, b_cat, *, tm):
    n_pad, f_in_pad = h.shape
    two_f = w_cat.shape[1]
    return pl.pallas_call(
        _pretransform_kernel,
        out_shape=jax.ShapeDtypeStruct((n_pad, two_f), jnp.bfloat16),
        grid_spec=pltpu.PrefetchScalarGridSpec(
            num_scalar_prefetch=0,
            grid=(n_pad // tm,),
            in_specs=[
                pl.BlockSpec((tm, f_in_pad), lambda i: (i, 0)),     # H row tile
                pl.BlockSpec((f_in_pad, two_f), lambda i: (0, 0)),  # [Ws | Wn] (resident)
                pl.BlockSpec((1, two_f), lambda i: (0, 0)),         # [b | 0]   (resident)
            ],
            out_specs=pl.BlockSpec((tm, two_f), lambda i: (i, 0)),
        ),
        compiler_params=pltpu.CompilerParams(dimension_semantics=("parallel",)),
    )(h, w_cat, b_cat)


# ----------------------------------------------------------------------------
# Kernel 2: K-tiled mean aggregation + epilogue
#   out[i] = inv_deg[i] * (sum_k A8[i, k] @ P[k]) + S[i]   (+ ReLU if not last)
# ----------------------------------------------------------------------------
def _aggregate_kernel(a_ref, p_ref, s_ref, d_ref, o_ref, acc_ref, *,
                      apply_relu, p_resident, tk):
    k = pl.program_id(1)

    @pl.when(k == 0)
    def _init():
        acc_ref[...] = jnp.zeros_like(acc_ref)

    if p_resident:
        # P is fully VMEM-resident (DMA'd once); slice the k-th source block.
        start = pl.multiple_of(k * tk, tk)
        p_blk = p_ref[pl.ds(start, tk), :]
    else:
        p_blk = p_ref[...]

    # int8 0/1 adjacency -> bf16 (via f32; portable int->float path on all gens),
    # bf16 MXU matmul, f32 accumulation.
    a_bf16 = a_ref[...].astype(jnp.float32).astype(jnp.bfloat16)
    acc_ref[...] += jnp.dot(a_bf16, p_blk, preferred_element_type=jnp.float32)

    @pl.when(k == pl.num_programs(1) - 1)
    def _finalize():
        out = acc_ref[...] * d_ref[...] + s_ref[...].astype(jnp.float32)
        if apply_relu:
            out = jnp.maximum(out, 0.0)
        o_ref[...] = out.astype(o_ref.dtype)


def sage_aggregate(a8, z, inv_deg, *, f_pad, tm, tk, apply_relu, out_dtype,
                   p_resident_max_bytes=8 * 1024 * 1024):
    nr, nc = a8.shape

    # P residency decision: double-buffered bf16 (nc, f_pad) block.
    p_res_bytes = 2 * nc * f_pad * 2
    p_resident = p_res_bytes <= p_resident_max_bytes
    if p_resident:
        # Constant block index across the whole grid -> fetched from HBM once.
        p_spec = pl.BlockSpec((nc, f_pad), lambda i, k: (0, 1))
    else:
        # Fallback: stream P per k-tile (re-stream cost amortized by large tm).
        p_spec = pl.BlockSpec((tk, f_pad), lambda i, k: (k, 1))

    # Rough VMEM estimate (double buffers + f32 accumulator); set the scoped
    # limit explicitly so larger tiles stay safe on v7x (64 MiB physical).
    est = (2 * tm * tk                                   # A tiles (int8)
           + (p_res_bytes if p_resident else 2 * tk * f_pad * 2)
           + 2 * tm * f_pad * 2                          # S tiles (bf16)
           + 2 * tm * LANE * 4                           # inv_deg (lane-padded)
           + 2 * tm * f_pad * 4                          # output tiles
           + tm * f_pad * 4)                             # f32 accumulator
    vmem_limit = int(max(32 * 1024 * 1024, min(2 * est, 60 * 1024 * 1024)))

    kernel = functools.partial(_aggregate_kernel, apply_relu=apply_relu,
                               p_resident=p_resident, tk=tk)
    return pl.pallas_call(
        kernel,
        out_shape=jax.ShapeDtypeStruct((nr, f_pad), out_dtype),
        grid_spec=pltpu.PrefetchScalarGridSpec(
            num_scalar_prefetch=0,
            grid=(nr // tm, nc // tk),
            in_specs=[
                pl.BlockSpec((tm, tk), lambda i, k: (i, k)),      # A int8 tile
                p_spec,                                            # P = Z[:, f_pad:]
                pl.BlockSpec((tm, f_pad), lambda i, k: (i, 0)),    # S = Z[:, :f_pad]
                pl.BlockSpec((tm, 1), lambda i, k: (i, 0)),        # 1/deg (f32)
            ],
            out_specs=pl.BlockSpec((tm, f_pad), lambda i, k: (i, 0)),
            scratch_shapes=[pltpu.VMEM((tm, f_pad), jnp.float32)],
        ),
        compiler_params=pltpu.CompilerParams(
            dimension_semantics=("parallel", "arbitrary"),
            vmem_limit_bytes=vmem_limit,
        ),
    )(a8, z, z, inv_deg)


# ----------------------------------------------------------------------------
# Parameter setup
# ----------------------------------------------------------------------------
def init_sage_params(key, in_feats, n_hidden, n_classes, n_layers):
    """Deterministic Xavier-ish init; weights stored as (F_in, F_out)."""
    if n_layers > 1:
        dims = [(in_feats, n_hidden)]
        dims += [(n_hidden, n_hidden) for _ in range(n_layers - 2)]
        dims += [(n_hidden, n_classes)]
    else:
        dims = [(in_feats, n_classes)]

    params = []
    for fi, fo in dims:
        key, k1, k2 = jax.random.split(key, 3)
        scale = (2.0 / (fi + fo)) ** 0.5
        w_neigh = scale * jax.random.normal(k1, (fi, fo), jnp.float32)
        w_self = scale * jax.random.normal(k2, (fi, fo), jnp.float32)
        b = jnp.zeros((fo,), jnp.float32)
        params.append((w_neigh, w_self, b))
    return params


def prepare_sage_params(params, *, f_pad=LANE):
    """One-time packing into lane-dense fused [W_self | W_neigh] / [b | 0]."""
    prepped = []
    for w_neigh, w_self, b in params:
        fi, fo = w_neigh.shape
        assert fi <= f_pad and fo <= f_pad
        w_cat = jnp.zeros((f_pad, 2 * f_pad), jnp.bfloat16)
        w_cat = w_cat.at[:fi, :fo].set(w_self.astype(jnp.bfloat16))
        w_cat = w_cat.at[:fi, f_pad:f_pad + fo].set(w_neigh.astype(jnp.bfloat16))
        b_cat = jnp.zeros((1, 2 * f_pad), jnp.float32).at[0, :fo].set(b)
        prepped.append((w_cat, b_cat, fo))
    return prepped


# ----------------------------------------------------------------------------
# SAGE forward (DGLGraph branch, eval mode) via Pallas kernels
# ----------------------------------------------------------------------------
def sage_forward(adj01, x, prepped, *, tm=256, tk=512, f_pad=LANE):
    """adj01: dense 0/1 adjacency (dest rows, src cols); x: node features."""
    assert tk % tm == 0, "tk must be a multiple of tm"
    n = x.shape[0]
    assert x.shape[1] <= f_pad

    nr = _round_up(n, tm)          # destination rows of A
    nc = _round_up(n, tk)          # source columns of A
    np_ = max(nr, nc)              # node-feature padding (rows of H / Z)

    # 0/1 adjacency as int8 (half the HBM bytes of bf16; padded rows/cols zero).
    a8 = jnp.zeros((nr, nc), jnp.int8).at[:n, :n].set(adj01.astype(jnp.int8))
    deg = jnp.sum(adj01.astype(jnp.float32), axis=1)
    inv_deg = jnp.zeros((nr, 1), jnp.float32)
    inv_deg = inv_deg.at[:n, 0].set(1.0 / jnp.maximum(deg, 1.0))  # DGL: 0-deg -> 0

    h = jnp.zeros((np_, f_pad), jnp.bfloat16)
    h = h.at[:n, :x.shape[1]].set(x.astype(jnp.bfloat16))

    n_layers = len(prepped)
    fo_last = prepped[-1][2]
    for l, (w_cat, b_cat, _fo) in enumerate(prepped):
        z = sage_pretransform(h, w_cat, b_cat, tm=tm)

        last = l == n_layers - 1
        out = sage_aggregate(
            a8, z, inv_deg, f_pad=f_pad, tm=tm, tk=tk,
            apply_relu=not last,
            out_dtype=jnp.float32 if last else jnp.bfloat16,
        )
        # dropout in eval mode -> identity
        if last:
            h = out
        else:
            if np_ > nr:   # re-pad source rows for the next layer's P
                out = jnp.concatenate(
                    [out, jnp.zeros((np_ - nr, f_pad), out.dtype)], axis=0)
            h = out

    return h[:n, :fo_last]


# ----------------------------------------------------------------------------
# References
# ----------------------------------------------------------------------------
def sage_forward_ref_f32(a_mean, x, params):
    """Original-order, full-f32 reference (spec semantics)."""
    h = x
    nl = len(params)
    for l, (wn, ws, b) in enumerate(params):
        h = h @ ws + (a_mean @ h) @ wn + b[None, :]
        if l != nl - 1:
            h = jnp.maximum(h, 0.0)
    return h


def sage_forward_ref_matched(adj01, x, params):
    """Reference mirroring the kernel's bf16 casts, A@(H@Wn) order, f32 1/deg."""
    a = adj01.astype(jnp.bfloat16)                       # 0/1, exact in bf16
    deg = jnp.sum(adj01.astype(jnp.float32), axis=1, keepdims=True)
    inv_deg = 1.0 / jnp.maximum(deg, 1.0)
    h = x.astype(jnp.bfloat16)
    nl = len(params)
    for l, (wn, ws, b) in enumerate(params):
        wn_b = wn.astype(jnp.bfloat16)
        ws_b = ws.astype(jnp.bfloat16)
        s = (jnp.dot(h, ws_b, preferred_element_type=jnp.float32)
             + b[None, :]).astype(jnp.bfloat16)
        p = jnp.dot(h, wn_b, preferred_element_type=jnp.float32).astype(jnp.bfloat16)
        neigh = jnp.dot(a, p, preferred_element_type=jnp.float32) * inv_deg
        out = neigh + s.astype(jnp.float32)
        if l != nl - 1:
            out = jnp.maximum(out, 0.0)
            h = out.astype(jnp.bfloat16)
        else:
            h = out
    return h


if __name__ == "__main__":
    # N=700 exercises: multi-row-tile grid, K-tiled accumulation, resident-P
    # slicing, independent row/col padding, and the inter-layer re-pad path.
    N, IN_FEATS, N_HIDDEN, N_CLASSES, N_LAYERS = 700, 32, 32, 8, 3

    key = jax.random.PRNGKey(0)
    k_adj, k_x, k_param = jax.random.split(key, 3)

    # Random graph -> dense 0/1 adjacency; mean aggregation via 1/deg epilogue.
    adj = (jax.random.uniform(k_adj, (N, N)) < 0.05).astype(jnp.float32)
    deg = jnp.sum(adj, axis=1, keepdims=True)
    a_mean = adj / jnp.maximum(deg, 1.0)  # zero-degree rows aggregate to 0 (DGL)

    x = jax.random.normal(k_x, (N, IN_FEATS), jnp.float32)
    params = init_sage_params(k_param, IN_FEATS, N_HIDDEN, N_CLASSES, N_LAYERS)
    prepped = prepare_sage_params(params)   # hoisted one-time weight packing

    out = sage_forward(adj, x, prepped)
    out = jax.block_until_ready(out)
    assert out.shape == (N, N_CLASSES)

    # Tight check against a reference with matching precision / ordering.
    ref_matched = sage_forward_ref_matched(adj, x, params)
    assert jnp.allclose(out, ref_matched, atol=2e-2, rtol=2e-2), \
        "mismatch vs matched-precision reference"

    # Loose check against the original-order full-f32 semantics.
    ref_f32 = sage_forward_ref_f32(a_mean, x, params)
    assert jnp.allclose(out, ref_f32, atol=2e-1, rtol=2e-1), \
        "mismatch vs f32 reference"

    print("KERNEL_OK")
</pallas_src>

<mosaic_0001>
module attributes {stable_mosaic.version = 11 : i64} {
  func.func @_pretransform_kernel(%arg0: i32, %arg1: memref<256x128xbf16, #tpu.memory_space<vmem>>, %arg2: memref<128x256xbf16, #tpu.memory_space<vmem>>, %arg3: memref<1x256xf32, #tpu.memory_space<vmem>>, %arg4: memref<256x256xbf16, #tpu.memory_space<vmem>>) attributes {dimension_semantics = [#tpu.dimension_semantics<parallel>], iteration_bounds = array<i64: 4>, scalar_prefetch = 0 : i64, scratch_operands = 0 : i64, tpu.core_type = #tpu.core_type<tc>, window_params = [{transform_indices = @transform_0, window_bounds = array<i64: 256, 128>}, {pipeline_mode = #tpu.pipeline_mode<synchronous>, transform_indices = @transform_1, window_bounds = array<i64: 128, 256>}, {pipeline_mode = #tpu.pipeline_mode<synchronous>, transform_indices = @transform_2, window_bounds = array<i64: 1, 256>}, {transform_indices = @transform_3, window_bounds = array<i64: 256, 256>}]} {
    %c0 = arith.constant 0 : index
    %c0_0 = arith.constant 0 : index
    %0 = vector.load %arg1[%c0, %c0_0] : memref<256x128xbf16, #tpu.memory_space<vmem>>, vector<256x128xbf16>
    %c0_1 = arith.constant 0 : index
    %c0_2 = arith.constant 0 : index
    %1 = vector.load %arg2[%c0_1, %c0_2] : memref<128x256xbf16, #tpu.memory_space<vmem>>, vector<128x256xbf16>
    %cst = arith.constant dense<0.000000e+00> : vector<256x256xf32>
    %2 = tpu.matmul %0, %1, %cst {dimension_numbers = #tpu.dot_dimension_numbers<[1], [0], [0], [1], [0, 0, 1, 1], [], []>} : vector<256x128xbf16>, vector<128x256xbf16>, vector<256x256xf32> -> vector<256x256xf32>
    %c0_3 = arith.constant 0 : index
    %c0_4 = arith.constant 0 : index
    %3 = vector.load %arg3[%c0_3, %c0_4] : memref<1x256xf32, #tpu.memory_space<vmem>>, vector<1x256xf32>
    %4 = vector.broadcast %3 : vector<1x256xf32> to vector<256x256xf32>
    %5 = arith.addf %2, %4 : vector<256x256xf32>
    %6 = arith.truncf %5 : vector<256x256xf32> to vector<256x256xbf16>
    %c0_5 = arith.constant 0 : index
    %c0_6 = arith.constant 0 : index
    %7 = vector.load %arg4[%c0_5, %c0_6] : memref<256x256xbf16, #tpu.memory_space<vmem>>, vector<256x256xbf16>
    tpu.vector_store %arg4[%c0_5, %c0_6], %6 {strides = array<i32>} : memref<256x256xbf16, #tpu.memory_space<vmem>>, vector<256x256xbf16>,
    return
  }
  func.func @transform_0(%arg0: i32) -> (i32, i32) {
    %c0_i32 = arith.constant 0 : i32
    %c0_i32_0 = arith.constant 0 : i32
    return %arg0, %c0_i32 : i32, i32
  }
  func.func @transform_1(%arg0: i32) -> (i32, i32) {
    %c0_i32 = arith.constant 0 : i32
    %c0_i32_0 = arith.constant 0 : i32
    %c0_i32_1 = arith.constant 0 : i32
    return %c0_i32, %c0_i32_0 : i32, i32
  }
  func.func @transform_2(%arg0: i32) -> (i32, i32) {
    %c0_i32 = arith.constant 0 : i32
    %c0_i32_0 = arith.constant 0 : i32
    %c0_i32_1 = arith.constant 0 : i32
    return %c0_i32, %c0_i32_0 : i32, i32
  }
  func.func @transform_3(%arg0: i32) -> (i32, i32) {
    %c0_i32 = arith.constant 0 : i32
    %c0_i32_0 = arith.constant 0 : i32
    return %arg0, %c0_i32 : i32, i32
  }
}

</mosaic_0001>

<llo_original>
// kernel: tpu_custom_call.1
$region0: #{tpu_custom_call.1}
  #allocation0 [shape = 'u32[]', space=smem, size = 0x4, offset = 0x4, fixed_abs, tag = 'smem constant byte address 0x4 - core index']
  #allocation1 [shape = 'u32[144,128]{1,0:T(1,128)}', space=vmem, size = 0x12000, scoped, tag = 'internal scratch']
  %s0 = inlined_call_operand.hbm [shape: bf16[1024,128], index: 0, kind: input, shape index: {}]
  %s1 = inlined_call_operand.hbm [shape: bf16[128,256], index: 1, kind: input, shape index: {}]
  %s2 = inlined_call_operand.vmem [shape: f32[1,256], index: 2, kind: input, shape index: {}]
  %s3 = inlined_call_operand.hbm [shape: bf16[1024,256], index: 3, kind: output, shape index: {}]
  %s4 = sld [smem:[#allocation0]]
  $region53: #{tpu_custom_call.1} parent=0
    _
  %s6 = ssub.s32 1, %s4
  %s7 = scalar_select 0, %s6, %s4
  $region1: #{tpu_custom_call.1} parent=0
    #allocation2 [shape = 'u8[131072]{0}', space=vmem, size = 0x20000, scoped, tag = 'input window, operand 0']
    #allocation3 [shape = 's32[2]{0}', space=sflag, size = 0x8, scoped, tag = 'scoped memory for tpu_custom_call.1']
    #allocation4 [shape = 's32[2]{0}', space=sflag, size = 0x8, scoped, tag = 'scoped memory for tpu_custom_call.1']
    #allocation5 [shape = 'u8[65536]{0}', space=vmem, size = 0x10000, scoped, tag = 'input window, operand 1, single buffered']
    #allocation6 [shape = 's32[1]{0}', space=sflag, size = 0x4, scoped, tag = 'scoped memory for tpu_custom_call.1']
    #allocation7 [shape = 'u8[262144]{0}', space=vmem, size = 0x40000, scoped, tag = 'output window, operand 0']
    %8 = vsyncpa [#allocation3], 0
    %s9 = scalar_lea.sflag [#allocation3], 1
    %10 = vsyncpa %s9, 0
    %11 = vsyncpa [#allocation6], 0
    %12 = vsyncpa [#allocation4], 0
    %s13 = scalar_lea.sflag [#allocation4], 1
    %14 = vsyncpa %s13, 0
    loop: start=0, step=1, limit=6
    $region2: #{tpu_custom_call.1} parent=1 // loop_pre_header
      _
    $region3: #{tpu_custom_call.1} parent=1 // loop_header
      %s16 = sphi 0, %s20
      %p17 = scmp.ge.s32.totalorder %s16, 6
      %s26 = sphi 0, %s28
      %s29 = sphi 0, %s26
      %s30 = sphi 0, %s29
      %s46 = sphi 0, %s30
      %s50 = sphi 0, %s50
      %s52 = sphi 0, %s50
      %s53 = sphi 0, %s52
      %s67 = sphi 0, %s53
      %s71 = sphi 0, %s71
      %s73 = sphi 0, %s71
      %s74 = sphi 0, %s73
      %s88 = sphi 0, %s74
      %s94 = sphi 0, %s96
      %s97 = sphi 0, %s94
      %s98 = sphi 0, %s97
      %s114 = sphi 0, %s98
    $region4: #{tpu_custom_call.1} parent=1 // loop_header_branch
      %19 = sbr.rel (%p17) target = $region8
    $region5: #{tpu_custom_call.1} parent=1 // loop_body
      %s21 = ssub.s32 %s16, 1
      %s22 = ssub.s32 %s16, 2
      %s23 = sadd.s32 %s16, 1
      %s24 = ssub.s32 %s16, %s23
      %p25 = scmp.eq.s32.totalorder %s24, 0
      %s27 = sadd.s32 %s26, 1
      %s28 = scalar_select %p25, %s26, %s27
      %p31 = pneg %p25
      %p32 = scmp.eq.s32.totalorder %s16, 3
      %p33 = por %p31, %p32
      %p34 = scmp.ne.s32.totalorder %s26, %s29
      %p35 = scmp.eq.s32.totalorder %s16, 0
      %p36 = por %p34, %p35
      %p37 = scmp.ne.s32.totalorder %s26, %s29
      %p38 = scmp.eq.s32.totalorder %s21, 3
      %p39 = por %p37, %p38
      %p40 = scmp.ne.s32.totalorder %s29, %s30
      %p41 = scmp.eq.s32.totalorder %s21, 0
      %p42 = por %p40, %p41
      %p43 = scmp.ne.s32.totalorder %s29, %s30
      %p44 = scmp.eq.s32.totalorder %s22, 3
      %p45 = por %p43, %p44
      %p47 = scmp.ne.s32.totalorder %s30, %s46
      %p48 = scmp.eq.s32.totalorder %s22, 0
      %p49 = por %p47, %p48
      %s51 = sadd.s32 %s50, 1
      %p54 = scmp.eq.s32.totalorder %s16, 3
      %p55 = scmp.ne.s32.totalorder %s50, %s52
      %p56 = scmp.eq.s32.totalorder %s16, 0
      %p57 = por %p55, %p56
      %p58 = scmp.ne.s32.totalorder %s50, %s52
      %p59 = scmp.eq.s32.totalorder %s21, 3
      %p60 = por %p58, %p59
      %p61 = scmp.ne.s32.totalorder %s52, %s53
      %p62 = scmp.eq.s32.totalorder %s21, 0
      %p63 = por %p61, %p62
      %p64 = scmp.ne.s32.totalorder %s52, %s53
      %p65 = scmp.eq.s32.totalorder %s22, 3
      %p66 = por %p64, %p65
      %p68 = scmp.ne.s32.totalorder %s53, %s67
      %p69 = scmp.eq.s32.totalorder %s22, 0
      %p70 = por %p68, %p69
      %s72 = sadd.s32 %s71, 1
      %p75 = scmp.eq.s32.totalorder %s16, 3
      %p76 = scmp.ne.s32.totalorder %s71, %s73
      %p77 = scmp.eq.s32.totalorder %s16, 0
      %p78 = por %p76, %p77
      %p79 = scmp.ne.s32.totalorder %s71, %s73
      %p80 = scmp.eq.s32.totalorder %s21, 3
      %p81 = por %p79, %p80
      %p82 = scmp.ne.s32.totalorder %s73, %s74
      %p83 = scmp.eq.s32.totalorder %s21, 0
      %p84 = por %p82, %p83
      %p85 = scmp.ne.s32.totalorder %s73, %s74
      %p86 = scmp.eq.s32.totalorder %s22, 3
      %p87 = por %p85, %p86
      %p89 = scmp.ne.s32.totalorder %s74, %s88
      %p90 = scmp.eq.s32.totalorder %s22, 0
      %p91 = por %p89, %p90
      %s92 = ssub.s32 %s16, %s23
      %p93 = scmp.eq.s32.totalorder %s92, 0
      %s95 = sadd.s32 %s94, 1
      %s96 = scalar_select %p93, %s94, %s95
      %p99 = pneg %p93
      %p100 = scmp.eq.s32.totalorder %s16, 3
      %p101 = por %p99, %p100
      %p102 = scmp.ne.s32.totalorder %s94, %s97
      %p103 = scmp.eq.s32.totalorder %s16, 0
      %p104 = por %p102, %p103
      %p105 = scmp.ne.s32.totalorder %s94, %s97
      %p106 = scmp.eq.s32.totalorder %s21, 3
      %p107 = por %p105, %p106
      %p108 = scmp.ne.s32.totalorder %s97, %s98
      %p109 = scmp.eq.s32.totalorder %s21, 0
      %p110 = por %p108, %p109
      %p111 = scmp.ne.s32.totalorder %s97, %s98
      %p112 = scmp.eq.s32.totalorder %s22, 3
      %p113 = por %p111, %p112
      %p115 = scmp.ne.s32.totalorder %s98, %s114
      %p116 = scmp.eq.s32.totalorder %s22, 0
      %p117 = por %p115, %p116
      %p118 = scmp.le.s32.totalorder 1, %s16
      %p119 = scmp.lt.s32.totalorder %s16, 5
      %p120 = pnand %p118, %p119
      %p121 = pneg %p120
      // Predicated region
      $region9: #{tpu_custom_call.1} parent=5 // pred_check
        _
      $region10: #{tpu_custom_call.1} parent=5 // pred_check_branch
        %123 = sbr.rel (%p120) target = $region12
      $region11: #{tpu_custom_call.1} parent=5 // pred_region
        %s124 = ssub.s32 %s16, 1
        // Predicated region
        $region13: #{tpu_custom_call.1} parent=11 // pred_check
          %p125 = pneg %p63
        $region14: #{tpu_custom_call.1} parent=11 // pred_check_branch
          %127 = sbr.rel (%p125) target = $region16
        $region15: #{tpu_custom_call.1} parent=11 // pred_region
          %s129 = ssub.s32 2048, 2048
          %130 = vsyncadd [#allocation6], %s129
          %s131 = sshll.u32 [#allocation5], 4
          %s132 = int_to_ptr.vmem [resolvable:$true] %s131
          %137 = dma.hbm_to_vmem [thread:$0]  %s1, 2048, %s132, [#allocation6], 128, 128, 8
        $region16: #{tpu_custom_call.1} parent=11 // pred_fallthru
          _
        // Predicated region
        $region17: #{tpu_custom_call.1} parent=11 // pred_check
          %p138 = pneg %p84
        $region18: #{tpu_custom_call.1} parent=11 // pred_check_branch
          %140 = sbr.rel (%p138) target = $region20
        $region19: #{tpu_custom_call.1} parent=11 // pred_region
          _
        $region20: #{tpu_custom_call.1} parent=11 // pred_fallthru
          _
      $region12: #{tpu_custom_call.1} parent=5 // pred_fallthru
        _
      %p141 = scmp.lt.s32.totalorder %s16, 4
      // Predicated region
      $region21: #{tpu_custom_call.1} parent=5 // pred_check
        %p142 = pneg %p141
      $region22: #{tpu_custom_call.1} parent=5 // pred_check_branch
        %144 = sbr.rel (%p142) target = $region24
      $region23: #{tpu_custom_call.1} parent=5 // pred_region
        // Predicated region
        $region25: #{tpu_custom_call.1} parent=23 // pred_check
          %p145 = pneg %p36
        $region26: #{tpu_custom_call.1} parent=23 // pred_check_branch
          %147 = sbr.rel (%p145) target = $region28
        $region27: #{tpu_custom_call.1} parent=23 // pred_region
          %s148 = sand.u32 %s26, 1
          %s149 = scalar_lea.sflag [#allocation3], %s148
          %s150 = sand.u32 %s26, 1
          %s151 = smul.addr %s150, 128
          %s152 = scalar_lea.vmem [#allocation2], %s151
          %s153 = smul.u32 32, %s16
          %s155 = ssub.s32 2048, 2048
          %156 = vsyncadd %s149, %s155
          %s157 = smul.addr %s153, 64
          %s158 = scalar_lea.hbm %s0, %s157
          %s159 = sshll.u32 %s152, 4
          %s160 = int_to_ptr.vmem [resolvable:$true] %s159
          %165 = dma.hbm_to_vmem [thread:$0]  %s158, 2048, %s160, %s149, 64, 64, 4
        $region28: #{tpu_custom_call.1} parent=23 // pred_fallthru
          _
      $region24: #{tpu_custom_call.1} parent=5 // pred_fallthru
        _
      %p166 = scmp.le.s32.totalorder 1, %s16
      %p167 = scmp.lt.s32.totalorder %s16, 5
      %p168 = pnand %p166, %p167
      %p169 = pneg %p168
      // Predicated region
      $region29: #{tpu_custom_call.1} parent=5 // pred_check
        _
      $region30: #{tpu_custom_call.1} parent=5 // pred_check_branch
        %171 = sbr.rel (%p168) target = $region32
      $region31: #{tpu_custom_call.1} parent=5 // pred_region
        %s172 = ssub.s32 %s16, 1
        %s173 = sand.u32 %s29, 1
        %s174 = scalar_lea.sflag [#allocation3], %s173
        %s175 = sand.u32 %s29, 1
        %s176 = smul.addr %s175, 128
        %s177 = scalar_lea.vmem [#allocation2], %s176
        // Predicated region
        $region33: #{tpu_custom_call.1} parent=31 // pred_check
          %p178 = pneg %p42
        $region34: #{tpu_custom_call.1} parent=31 // pred_check_branch
          %180 = sbr.rel (%p178) target = $region36
        $region35: #{tpu_custom_call.1} parent=31 // pred_region
          %181 = dma.done %s174, 2048
        $region36: #{tpu_custom_call.1} parent=31 // pred_fallthru
          _
        // Predicated region
        $region37: #{tpu_custom_call.1} parent=31 // pred_check
          %p182 = pneg %p63
        $region38: #{tpu_custom_call.1} parent=31 // pred_check_branch
          %184 = sbr.rel (%p182) target = $region40
        $region39: #{tpu_custom_call.1} parent=31 // pred_region
          %185 = dma.done [#allocation6], 2048
        $region40: #{tpu_custom_call.1} parent=31 // pred_fallthru
          _
        %s186 = sand.u32 %s29, 1
        %s187 = scalar_lea.sflag [#allocation3], %s186
        %s188 = sand.u32 %s29, 1
        %s189 = smul.addr %s188, 128
        %s190 = scalar_lea.vmem [#allocation2], %s189
        %p191 = pneg %p42
        %p192 = pneg %p39
        %p193 = pneg %p63
        %p194 = pneg %p60
        %p195 = pneg %p84
        %p196 = pneg %p81
        %p197 = pneg %p110
        %p198 = pneg %p107
        %s199 = sand.u32 %s97, 1
        %s200 = scalar_lea.sflag [#allocation4], %s199
        %s201 = sand.u32 %s97, 1
        %s202 = smul.addr %s201, 256
        %s203 = scalar_lea.vmem [#allocation7], %s202
        %s204 = smul.u32 32, %s21
        %s205 = smul.u32 32, %s21
        %v207 = vld [vmem:[%s177] sm:$0xf]
        %v208 = vld [vmem:[%s177 + $0x4] sm:$0xf]
        %v209 = vld [vmem:[%s177 + $0x8] sm:$0xf]
        %v210 = vld [vmem:[%s177 + $0xc] sm:$0xf]
        %v211 = vld [vmem:[%s177 + $0x10] sm:$0xf]
        %v212 = vld [vmem:[%s177 + $0x14] sm:$0xf]
        %v213 = vld [vmem:[%s177 + $0x18] sm:$0xf]
        %v214 = vld [vmem:[%s177 + $0x1c] sm:$0xf]
        %v215 = vld [vmem:[%s177 + $0x20] sm:$0xf]
        %v216 = vld [vmem:[%s177 + $0x24] sm:$0xf]
        %v217 = vld [vmem:[%s177 + $0x28] sm:$0xf]
        %v218 = vld [vmem:[%s177 + $0x2c] sm:$0xf]
        %v219 = vld [vmem:[%s177 + $0x30] sm:$0xf]
        %v220 = vld [vmem:[%s177 + $0x34] sm:$0xf]
        %v221 = vld [vmem:[%s177 + $0x38] sm:$0xf]
        %v222 = vld [vmem:[%s177 + $0x3c] sm:$0xf]
        %v223 = vld [vmem:[%s177 + $0x40] sm:$0xf]
        %v224 = vld [vmem:[%s177 + $0x44] sm:$0xf]
        %v225 = vld [vmem:[%s177 + $0x48] sm:$0xf]
        %v226 = vld [vmem:[%s177 + $0x4c] sm:$0xf]
        %v227 = vld [vmem:[%s177 + $0x50] sm:$0xf]
        %v228 = vld [vmem:[%s177 + $0x54] sm:$0xf]
        %v229 = vld [vmem:[%s177 + $0x58] sm:$0xf]
        %v230 = vld [vmem:[%s177 + $0x5c] sm:$0xf]
        %v231 = vld [vmem:[%s177 + $0x60] sm:$0xf]
        %v232 = vld [vmem:[%s177 + $0x64] sm:$0xf]
        %v233 = vld [vmem:[%s177 + $0x68] sm:$0xf]
        %v234 = vld [vmem:[%s177 + $0x6c] sm:$0xf]
        %v235 = vld [vmem:[%s177 + $0x70] sm:$0xf]
        %v236 = vld [vmem:[%s177 + $0x74] sm:$0xf]
        %v237 = vld [vmem:[%s177 + $0x78] sm:$0xf]
        %v238 = vld [vmem:[%s177 + $0x7c] sm:$0xf]
        %v239 = vld [vmem:[#allocation5] sm:$0xff]
        %v240 = vld [vmem:[#allocation5 + $0x8] sm:$0xff]
        %v241 = vld [vmem:[#allocation5 + $0x10] sm:$0xff]
        %v242 = vld [vmem:[#allocation5 + $0x18] sm:$0xff]
        %v243 = vld [vmem:[#allocation5 + $0x20] sm:$0xff]
        %v244 = vld [vmem:[#allocation5 + $0x28] sm:$0xff]
        %v245 = vld [vmem:[#allocation5 + $0x30] sm:$0xff]
        %v246 = vld [vmem:[#allocation5 + $0x38] sm:$0xff]
        %v247 = vld [vmem:[#allocation5 + $0x40] sm:$0xff]
        %v248 = vld [vmem:[#allocation5 + $0x48] sm:$0xff]
        %v249 = vld [vmem:[#allocation5 + $0x50] sm:$0xff]
        %v250 = vld [vmem:[#allocation5 + $0x58] sm:$0xff]
        %v251 = vld [vmem:[#allocation5 + $0x60] sm:$0xff]
        %v252 = vld [vmem:[#allocation5 + $0x68] sm:$0xff]
        %v253 = vld [vmem:[#allocation5 + $0x70] sm:$0xff]
        %v254 = vld [vmem:[#allocation5 + $0x78] sm:$0xff]
        %v255 = vld [vmem:[%s2] sm:$0x3]
        %v257 = vlaneseq
        %v258 = vshrl.u32 %v257, 7
        %v259 = vsub.s32 0, %v258
        %v260 = vrot.slane %v255, %v259
        %v261 = vlaneseq
        %v262 = vshrl.u32 %v261, 7
        %v263 = vsub.s32 1, %v262
        %v264 = vrot.slane %v255, %v263
        %v299 = vunpack.c.l.b16 %v207
        %v300 = vunpack.c.l.b16 %v208
        %v301 = vunpack.c.l.b16 %v209
        %v302 = vunpack.c.l.b16 %v210
        %v303 = vunpack.c.l.b16 %v211
        %v304 = vunpack.c.l.b16 %v212
        %v305 = vunpack.c.l.b16 %v213
        %v306 = vunpack.c.l.b16 %v214
        %v307 = vunpack.c.l.b16 %v215
        %v308 = vunpack.c.l.b16 %v216
        %v309 = vunpack.c.l.b16 %v217
        %v310 = vunpack.c.l.b16 %v218
        %v311 = vunpack.c.l.b16 %v219
        %v312 = vunpack.c.l.b16 %v220
        %v313 = vunpack.c.l.b16 %v221
        %v314 = vunpack.c.l.b16 %v222
        %v315 = vunpack.c.l.b16 %v223
        %v316 = vunpack.c.l.b16 %v224
        %v317 = vunpack.c.l.b16 %v225
        %v318 = vunpack.c.l.b16 %v226
        %v319 = vunpack.c.l.b16 %v227
        %v320 = vunpack.c.l.b16 %v228
        %v321 = vunpack.c.l.b16 %v229
        %v322 = vunpack.c.l.b16 %v230
        %v323 = vunpack.c.l.b16 %v231
        %v324 = vunpack.c.l.b16 %v232
        %v325 = vunpack.c.l.b16 %v233
        %v326 = vunpack.c.l.b16 %v234
        %v327 = vunpack.c.l.b16 %v235
        %v328 = vunpack.c.l.b16 %v236
        %v329 = vunpack.c.l.b16 %v237
        %v330 = vunpack.c.l.b16 %v238
        %v331 = vpack.c.b16 %v300, %v299
        %v332 = vpack.c.b16 %v302, %v301
        %v333 = vpack.c.b16 %v304, %v303
        %v334 = vpack.c.b16 %v306, %v305
        %v335 = vpack.c.b16 %v308, %v307
        %v336 = vpack.c.b16 %v310, %v309
        %v337 = vpack.c.b16 %v312, %v311
        %v338 = vpack.c.b16 %v314, %v313
        %v339 = vpack.c.b16 %v316, %v315
        %v340 = vpack.c.b16 %v318, %v317
        %v341 = vpack.c.b16 %v320, %v319
        %v342 = vpack.c.b16 %v322, %v321
        %v343 = vpack.c.b16 %v324, %v323
        %v344 = vpack.c.b16 %v326, %v325
        %v345 = vpack.c.b16 %v328, %v327
        %v346 = vpack.c.b16 %v330, %v329
        %v379 = vunpack.c.l.b16 %v239
        %v380 = vunpack.c.h.b16 %v239
        %v381 = vunpack.c.l.b16 %v240
        %v382 = vunpack.c.h.b16 %v240
        %v383 = vunpack.c.l.b16 %v241
        %v384 = vunpack.c.h.b16 %v241
        %v385 = vunpack.c.l.b16 %v242
        %v386 = vunpack.c.h.b16 %v242
        %v387 = vunpack.c.l.b16 %v243
        %v388 = vunpack.c.h.b16 %v243
        %v389 = vunpack.c.l.b16 %v244
        %v390 = vunpack.c.h.b16 %v244
        %v391 = vunpack.c.l.b16 %v245
        %v392 = vunpack.c.h.b16 %v245
        %v393 = vunpack.c.l.b16 %v246
        %v394 = vunpack.c.h.b16 %v246
        %v395 = vunpack.c.l.b16 %v247
        %v396 = vunpack.c.h.b16 %v247
        %v397 = vunpack.c.l.b16 %v248
        %v398 = vunpack.c.h.b16 %v248
        %v399 = vunpack.c.l.b16 %v249
        %v400 = vunpack.c.h.b16 %v249
        %v401 = vunpack.c.l.b16 %v250
        %v402 = vunpack.c.h.b16 %v250
        %v403 = vunpack.c.l.b16 %v251
        %v404 = vunpack.c.h.b16 %v251
        %v405 = vunpack.c.l.b16 %v252
        %v406 = vunpack.c.h.b16 %v252
        %v407 = vunpack.c.l.b16 %v253
        %v408 = vunpack.c.h.b16 %v253
        %v409 = vunpack.c.l.b16 %v254
        %v410 = vunpack.c.h.b16 %v254
        %v411 = vpack.c.b16 %v381, %v379
        %v412 = vpack.c.b16 %v382, %v380
        %v413 = vpack.c.b16 %v385, %v383
        %v414 = vpack.c.b16 %v386, %v384
        %v415 = vpack.c.b16 %v389, %v387
        %v416 = vpack.c.b16 %v390, %v388
        %v417 = vpack.c.b16 %v393, %v391
        %v418 = vpack.c.b16 %v394, %v392
        %v419 = vpack.c.b16 %v397, %v395
        %v420 = vpack.c.b16 %v398, %v396
        %v421 = vpack.c.b16 %v401, %v399
        %v422 = vpack.c.b16 %v402, %v400
        %v423 = vpack.c.b16 %v405, %v403
        %v424 = vpack.c.b16 %v406, %v404
        %v425 = vpack.c.b16 %v409, %v407
        %v426 = vpack.c.b16 %v410, %v408
        %443 = vmatprep.subr.bf16.mxu0 %v426
        %444 = vmatpush1.bf16.msra.mxu0 %v425
        %445 = vmatprep.subr.bf16.mxu0 %v424
        %446 = vmatpush1.bf16.msra.mxu0 %v423
        %447 = vmatprep.subr.bf16.mxu0 %v422
        %448 = vmatpush1.bf16.msra.mxu0 %v421
        %449 = vmatprep.subr.bf16.mxu0 %v420
        %450 = vmatpush1.bf16.msra.mxu0 %v419
        %451 = vmatprep.subr.bf16.mxu0 %v418
        %452 = vmatpush1.bf16.msra.mxu0 %v417
        %453 = vmatprep.subr.bf16.mxu0 %v416
        %454 = vmatpush1.bf16.msra.mxu0 %v415
        %455 = vmatprep.subr.bf16.mxu0 %v414
        %456 = vmatpush1.bf16.msra.mxu0 %v413
        %457 = vmatprep.subr.bf16.mxu0 %v412
        %458 = vmatpush1.bf16.msra.mxu0 %v411
        %459 = vmatprep.subr.bf16.mxu0 0
        %460 = vmatpush2.bf16.msra.mxu0 0
        %461 = vmatprep.subr.bf16.mxu0 0
        %462 = vmatpush2.bf16.msra.mxu0 0
        %463 = vmatprep.subr.bf16.mxu0 0
        %464 = vmatpush2.bf16.msra.mxu0 0
        %465 = vmatprep.subr.bf16.mxu0 0
        %466 = vmatpush2.bf16.msra.mxu0 0
        %467 = vmatprep.subr.bf16.mxu0 0
        %468 = vmatpush2.bf16.msra.mxu0 0
        %469 = vmatprep.subr.bf16.mxu0 0
        %470 = vmatpush2.bf16.msra.mxu0 0
        %471 = vmatprep.subr.bf16.mxu0 0
        %472 = vmatpush2.bf16.msra.mxu0 0
        %473 = vmatprep.subr.bf16.mxu0 0
        %474 = vmatpush2.bf16.msra.mxu0 0
        %475 = vmatprep.mubr.bf16.mxu0 0
        %476 = vmatmul.mubr.bf16.gmra.mxu0 %v331
        %v477 = vpop.f32.mrf.mxu0
        %v478 = vadd.f32 %v260, %v477
        %v479 = vpop.f32.mrf.mxu0
        %v480 = vadd.f32 %v264, %v479
        %v481 = vpop.f32.mrf.mxu0
        %v482 = vadd.f32 %v260, %v481
        %v483 = vpop.f32.mrf.mxu0
        %v484 = vadd.f32 %v264, %v483
        %485 = vmatprep.mubr.bf16.mxu0 0
        %486 = vmatmul.mubr.bf16.gmra.mxu0 %v332
        %v487 = vpop.f32.mrf.mxu0
        %v488 = vadd.f32 %v260, %v487
        %v489 = vpop.f32.mrf.mxu0
        %v490 = vadd.f32 %v264, %v489
        %v491 = vpop.f32.mrf.mxu0
        %v492 = vadd.f32 %v260, %v491
        %v493 = vpop.f32.mrf.mxu0
        %v494 = vadd.f32 %v264, %v493
        %495 = vmatprep.mubr.bf16.mxu0 0
        %496 = vmatmul.mubr.bf16.gmra.mxu0 %v333
        %v497 = vpop.f32.mrf.mxu0
        %v498 = vadd.f32 %v260, %v497
        %v499 = vpop.f32.mrf.mxu0
        %v500 = vadd.f32 %v264, %v499
        %v501 = vpop.f32.mrf.mxu0
        %v502 = vadd.f32 %v260, %v501
        %v503 = vpop.f32.mrf.mxu0
        %v504 = vadd.f32 %v264, %v503
        %505 = vmatprep.mubr.bf16.mxu0 0
        %506 = vmatmul.mubr.bf16.gmra.mxu0 %v334
        %v507 = vpop.f32.mrf.mxu0
        %v508 = vadd.f32 %v260, %v507
        %v509 = vpop.f32.mrf.mxu0
        %v510 = vadd.f32 %v264, %v509
        %v511 = vpop.f32.mrf.mxu0
        %v512 = vadd.f32 %v260, %v511
        %v513 = vpop.f32.mrf.mxu0
        %v514 = vadd.f32 %v264, %v513
        %515 = vmatprep.mubr.bf16.mxu0 0
        %516 = vmatmul.mubr.bf16.gmra.mxu0 %v335
        %v517 = vpop.f32.mrf.mxu0
        %v518 = vadd.f32 %v260, %v517
        %v519 = vpop.f32.mrf.mxu0
        %v520 = vadd.f32 %v264, %v519
        %v521 = vpop.f32.mrf.mxu0
        %v522 = vadd.f32 %v260, %v521
        %v523 = vpop.f32.mrf.mxu0
        %v524 = vadd.f32 %v264, %v523
        %525 = vmatprep.mubr.bf16.mxu0 0
        %526 = vmatmul.mubr.bf16.gmra.mxu0 %v336
        %v527 = vpop.f32.mrf.mxu0
        %v528 = vadd.f32 %v260, %v527
        %v529 = vpop.f32.mrf.mxu0
        %v530 = vadd.f32 %v264, %v529
        %v531 = vpop.f32.mrf.mxu0
        %v532 = vadd.f32 %v260, %v531
        %v533 = vpop.f32.mrf.mxu0
        %v534 = vadd.f32 %v264, %v533
        %535 = vmatprep.mubr.bf16.mxu0 0
        %536 = vmatmul.mubr.bf16.gmra.mxu0 %v337
        %v537 = vpop.f32.mrf.mxu0
        %v538 = vadd.f32 %v260, %v537
        %v539 = vpop.f32.mrf.mxu0
        %v540 = vadd.f32 %v264, %v539
        %v541 = vpop.f32.mrf.mxu0
        %v542 = vadd.f32 %v260, %v541
        %v543 = vpop.f32.mrf.mxu0
        %v544 = vadd.f32 %v264, %v543
        %545 = vmatprep.mubr.bf16.mxu0 0
        %546 = vmatmul.mubr.bf16.gmra.mxu0 %v338
        %v547 = vpop.f32.mrf.mxu0
        %v548 = vadd.f32 %v260, %v547
        %v549 = vpop.f32.mrf.mxu0
        %v550 = vadd.f32 %v264, %v549
        %v551 = vpop.f32.mrf.mxu0
        %v552 = vadd.f32 %v260, %v551
        %v553 = vpop.f32.mrf.mxu0
        %v554 = vadd.f32 %v264, %v553
        %555 = vmatprep.mubr.bf16.mxu0 0
        %556 = vmatmul.mubr.bf16.gmra.mxu0 %v339
        %v557 = vpop.f32.mrf.mxu0
        %v558 = vadd.f32 %v260, %v557
        %v559 = vpop.f32.mrf.mxu0
        %v560 = vadd.f32 %v264, %v559
        %v561 = vpop.f32.mrf.mxu0
        %v562 = vadd.f32 %v260, %v561
        %v563 = vpop.f32.mrf.mxu0
        %v564 = vadd.f32 %v264, %v563
        %565 = vmatprep.mubr.bf16.mxu0 0
        %566 = vmatmul.mubr.bf16.gmra.mxu0 %v340
        %v567 = vpop.f32.mrf.mxu0
        %v568 = vadd.f32 %v260, %v567
        %v569 = vpop.f32.mrf.mxu0
        %v570 = vadd.f32 %v264, %v569
        %v571 = vpop.f32.mrf.mxu0
        %v572 = vadd.f32 %v260, %v571
        %v573 = vpop.f32.mrf.mxu0
        %v574 = vadd.f32 %v264, %v573
        %575 = vmatprep.mubr.bf16.mxu0 0
        %576 = vmatmul.mubr.bf16.gmra.mxu0 %v341
        %v577 = vpop.f32.mrf.mxu0
        %v578 = vadd.f32 %v260, %v577
        %v579 = vpop.f32.mrf.mxu0
        %v580 = vadd.f32 %v264, %v579
        %v581 = vpop.f32.mrf.mxu0
        %v582 = vadd.f32 %v260, %v581
        %v583 = vpop.f32.mrf.mxu0
        %v584 = vadd.f32 %v264, %v583
        %585 = vmatprep.mubr.bf16.mxu0 0
        %586 = vmatmul.mubr.bf16.gmra.mxu0 %v342
        %v587 = vpop.f32.mrf.mxu0
        %v588 = vadd.f32 %v260, %v587
        %v589 = vpop.f32.mrf.mxu0
        %v590 = vadd.f32 %v264, %v589
        %v591 = vpop.f32.mrf.mxu0
        %v592 = vadd.f32 %v260, %v591
        %v593 = vpop.f32.mrf.mxu0
        %v594 = vadd.f32 %v264, %v593
        %595 = vmatprep.mubr.bf16.mxu0 0
        %596 = vmatmul.mubr.bf16.gmra.mxu0 %v343
        %v597 = vpop.f32.mrf.mxu0
        %v598 = vadd.f32 %v260, %v597
        %v599 = vpop.f32.mrf.mxu0
        %v600 = vadd.f32 %v264, %v599
        %v601 = vpop.f32.mrf.mxu0
        %v602 = vadd.f32 %v260, %v601
        %v603 = vpop.f32.mrf.mxu0
        %v604 = vadd.f32 %v264, %v603
        %605 = vmatprep.mubr.bf16.mxu0 0
        %606 = vmatmul.mubr.bf16.gmra.mxu0 %v344
        %v607 = vpop.f32.mrf.mxu0
        %v608 = vadd.f32 %v260, %v607
        %v609 = vpop.f32.mrf.mxu0
        %v610 = vadd.f32 %v264, %v609
        %v611 = vpop.f32.mrf.mxu0
        %v612 = vadd.f32 %v260, %v611
        %v613 = vpop.f32.mrf.mxu0
        %v614 = vadd.f32 %v264, %v613
        %615 = vmatprep.mubr.bf16.mxu0 0
        %616 = vmatmul.mubr.bf16.gmra.mxu0 %v345
        %v617 = vpop.f32.mrf.mxu0
        %v618 = vadd.f32 %v260, %v617
        %v619 = vpop.f32.mrf.mxu0
        %v620 = vadd.f32 %v264, %v619
        %v621 = vpop.f32.mrf.mxu0
        %v622 = vadd.f32 %v260, %v621
        %v623 = vpop.f32.mrf.mxu0
        %v624 = vadd.f32 %v264, %v623
        %625 = vmatprep.mubr.bf16.mxu0 0
        %626 = vmatmul.mubr.bf16.gmra.mxu0 %v346
        %v627 = vpop.f32.mrf.mxu0
        %v628 = vadd.f32 %v260, %v627
        %v629 = vpop.f32.mrf.mxu0
        %v630 = vadd.f32 %v264, %v629
        %v631 = vpop.f32.mrf.mxu0
        %v632 = vadd.f32 %v260, %v631
        %v633 = vpop.f32.mrf.mxu0
        %v634 = vadd.f32 %v264, %v633
        %635 = vdwg.mxu0
        %v636 = vpack.c.bf16 %v482, %v478
        %v637 = vpack.c.bf16 %v484, %v480
        %v638 = vpack.c.bf16 %v492, %v488
        %v639 = vpack.c.bf16 %v494, %v490
        %v640 = vpack.c.bf16 %v502, %v498
        %v641 = vpack.c.bf16 %v504, %v500
        %v642 = vpack.c.bf16 %v512, %v508
        %v643 = vpack.c.bf16 %v514, %v510
        %v644 = vpack.c.bf16 %v522, %v518
        %v645 = vpack.c.bf16 %v524, %v520
        %v646 = vpack.c.bf16 %v532, %v528
        %v647 = vpack.c.bf16 %v534, %v530
        %v648 = vpack.c.bf16 %v542, %v538
        %v649 = vpack.c.bf16 %v544, %v540
        %v650 = vpack.c.bf16 %v552, %v548
        %v651 = vpack.c.bf16 %v554, %v550
        %v652 = vpack.c.bf16 %v562, %v558
        %v653 = vpack.c.bf16 %v564, %v560
        %v654 = vpack.c.bf16 %v572, %v568
        %v655 = vpack.c.bf16 %v574, %v570
        %v656 = vpack.c.bf16 %v582, %v578
        %v657 = vpack.c.bf16 %v584, %v580
        %v658 = vpack.c.bf16 %v592, %v588
        %v659 = vpack.c.bf16 %v594, %v590
        %v660 = vpack.c.bf16 %v602, %v598
        %v661 = vpack.c.bf16 %v604, %v600
        %v662 = vpack.c.bf16 %v612, %v608
        %v663 = vpack.c.bf16 %v614, %v610
        %v664 = vpack.c.bf16 %v622, %v618
        %v665 = vpack.c.bf16 %v624, %v620
        %v666 = vpack.c.bf16 %v632, %v628
        %v667 = vpack.c.bf16 %v634, %v630
        %v700 = vunpack.c.l.b16 %v636
        %v701 = vunpack.c.l.b16 %v637
        %v702 = vunpack.c.h.b16 %v636
        %v703 = vunpack.c.h.b16 %v637
        %v704 = vunpack.c.l.b16 %v638
        %v705 = vunpack.c.l.b16 %v639
        %v706 = vunpack.c.h.b16 %v638
        %v707 = vunpack.c.h.b16 %v639
        %v708 = vunpack.c.l.b16 %v640
        %v709 = vunpack.c.l.b16 %v641
        %v710 = vunpack.c.h.b16 %v640
        %v711 = vunpack.c.h.b16 %v641
        %v712 = vunpack.c.l.b16 %v642
        %v713 = vunpack.c.l.b16 %v643
        %v714 = vunpack.c.h.b16 %v642
        %v715 = vunpack.c.h.b16 %v643
        %v716 = vunpack.c.l.b16 %v644
        %v717 = vunpack.c.l.b16 %v645
        %v718 = vunpack.c.h.b16 %v644
        %v719 = vunpack.c.h.b16 %v645
        %v720 = vunpack.c.l.b16 %v646
        %v721 = vunpack.c.l.b16 %v647
        %v722 = vunpack.c.h.b16 %v646
        %v723 = vunpack.c.h.b16 %v647
        %v724 = vunpack.c.l.b16 %v648
        %v725 = vunpack.c.l.b16 %v649
        %v726 = vunpack.c.h.b16 %v648
        %v727 = vunpack.c.h.b16 %v649
        %v728 = vunpack.c.l.b16 %v650
        %v729 = vunpack.c.l.b16 %v651
        %v730 = vunpack.c.h.b16 %v650
        %v731 = vunpack.c.h.b16 %v651
        %v732 = vunpack.c.l.b16 %v652
        %v733 = vunpack.c.l.b16 %v653
        %v734 = vunpack.c.h.b16 %v652
        %v735 = vunpack.c.h.b16 %v653
        %v736 = vunpack.c.l.b16 %v654
        %v737 = vunpack.c.l.b16 %v655
        %v738 = vunpack.c.h.b16 %v654
        %v739 = vunpack.c.h.b16 %v655
        %v740 = vunpack.c.l.b16 %v656
        %v741 = vunpack.c.l.b16 %v657
        %v742 = vunpack.c.h.b16 %v656
        %v743 = vunpack.c.h.b16 %v657
        %v744 = vunpack.c.l.b16 %v658
        %v745 = vunpack.c.l.b16 %v659
        %v746 = vunpack.c.h.b16 %v658
        %v747 = vunpack.c.h.b16 %v659
        %v748 = vunpack.c.l.b16 %v660
        %v749 = vunpack.c.l.b16 %v661
        %v750 = vunpack.c.h.b16 %v660
        %v751 = vunpack.c.h.b16 %v661
        %v752 = vunpack.c.l.b16 %v662
        %v753 = vunpack.c.l.b16 %v663
        %v754 = vunpack.c.h.b16 %v662
        %v755 = vunpack.c.h.b16 %v663
        %v756 = vunpack.c.l.b16 %v664
        %v757 = vunpack.c.l.b16 %v665
        %v758 = vunpack.c.h.b16 %v664
        %v759 = vunpack.c.h.b16 %v665
        %v760 = vunpack.c.l.b16 %v666
        %v761 = vunpack.c.l.b16 %v667
        %v762 = vunpack.c.h.b16 %v666
        %v763 = vunpack.c.h.b16 %v667
        %v764 = vpack.c.b16 %v701, %v700
        %v765 = vpack.c.b16 %v703, %v702
        %v766 = vpack.c.b16 %v705, %v704
        %v767 = vpack.c.b16 %v707, %v706
        %v768 = vpack.c.b16 %v709, %v708
        %v769 = vpack.c.b16 %v711, %v710
        %v770 = vpack.c.b16 %v713, %v712
        %v771 = vpack.c.b16 %v715, %v714
        %v772 = vpack.c.b16 %v717, %v716
        %v773 = vpack.c.b16 %v719, %v718
        %v774 = vpack.c.b16 %v721, %v720
        %v775 = vpack.c.b16 %v723, %v722
        %v776 = vpack.c.b16 %v725, %v724
        %v777 = vpack.c.b16 %v727, %v726
        %v778 = vpack.c.b16 %v729, %v728
        %v779 = vpack.c.b16 %v731, %v730
        %v780 = vpack.c.b16 %v733, %v732
        %v781 = vpack.c.b16 %v735, %v734
        %v782 = vpack.c.b16 %v737, %v736
        %v783 = vpack.c.b16 %v739, %v738
        %v784 = vpack.c.b16 %v741, %v740
        %v785 = vpack.c.b16 %v743, %v742
        %v786 = vpack.c.b16 %v745, %v744
        %v787 = vpack.c.b16 %v747, %v746
        %v788 = vpack.c.b16 %v749, %v748
        %v789 = vpack.c.b16 %v751, %v750
        %v790 = vpack.c.b16 %v753, %v752
        %v791 = vpack.c.b16 %v755, %v754
        %v792 = vpack.c.b16 %v757, %v756
        %v793 = vpack.c.b16 %v759, %v758
        %v794 = vpack.c.b16 %v761, %v760
        %v795 = vpack.c.b16 %v763, %v762
        %828 = vst [vmem:[%s203] sm:$0xff] %v764
        %829 = vst [vmem:[%s203 + $0x8] sm:$0xff] %v765
        %830 = vst [vmem:[%s203 + $0x10] sm:$0xff] %v766
        %831 = vst [vmem:[%s203 + $0x18] sm:$0xff] %v767
        %832 = vst [vmem:[%s203 + $0x20] sm:$0xff] %v768
        %833 = vst [vmem:[%s203 + $0x28] sm:$0xff] %v769
        %834 = vst [vmem:[%s203 + $0x30] sm:$0xff] %v770
        %835 = vst [vmem:[%s203 + $0x38] sm:$0xff] %v771
        %836 = vst [vmem:[%s203 + $0x40] sm:$0xff] %v772
        %837 = vst [vmem:[%s203 + $0x48] sm:$0xff] %v773
        %838 = vst [vmem:[%s203 + $0x50] sm:$0xff] %v774
        %839 = vst [vmem:[%s203 + $0x58] sm:$0xff] %v775
        %840 = vst [vmem:[%s203 + $0x60] sm:$0xff] %v776
        %841 = vst [vmem:[%s203 + $0x68] sm:$0xff] %v777
        %842 = vst [vmem:[%s203 + $0x70] sm:$0xff] %v778
        %843 = vst [vmem:[%s203 + $0x78] sm:$0xff] %v779
        %844 = vst [vmem:[%s203 + $0x80] sm:$0xff] %v780
        %845 = vst [vmem:[%s203 + $0x88] sm:$0xff] %v781
        %846 = vst [vmem:[%s203 + $0x90] sm:$0xff] %v782
        %847 = vst [vmem:[%s203 + $0x98] sm:$0xff] %v783
        %848 = vst [vmem:[%s203 + $0xa0] sm:$0xff] %v784
        %849 = vst [vmem:[%s203 + $0xa8] sm:$0xff] %v785
        %850 = vst [vmem:[%s203 + $0xb0] sm:$0xff] %v786
        %851 = vst [vmem:[%s203 + $0xb8] sm:$0xff] %v787
        %852 = vst [vmem:[%s203 + $0xc0] sm:$0xff] %v788
        %853 = vst [vmem:[%s203 + $0xc8] sm:$0xff] %v789
        %854 = vst [vmem:[%s203 + $0xd0] sm:$0xff] %v790
        %855 = vst [vmem:[%s203 + $0xd8] sm:$0xff] %v791
        %856 = vst [vmem:[%s203 + $0xe0] sm:$0xff] %v792
        %857 = vst [vmem:[%s203 + $0xe8] sm:$0xff] %v793
        %858 = vst [vmem:[%s203 + $0xf0] sm:$0xff] %v794
        %859 = vst [vmem:[%s203 + $0xf8] sm:$0xff] %v795
        %s860 = sand.u32 %s97, 1
        %s861 = scalar_lea.sflag [#allocation4], %s860
        %s862 = sand.u32 %s97, 1
        %s863 = smul.addr %s862, 256
        %s864 = scalar_lea.vmem [#allocation7], %s863
        // Predicated region
        $region41: #{tpu_custom_call.1} parent=31 // pred_check
          %p865 = pneg %p107
        $region42: #{tpu_custom_call.1} parent=31 // pred_check_branch
          %867 = sbr.rel (%p865) target = $region44
        $region43: #{tpu_custom_call.1} parent=31 // pred_region
          %s868 = smul.u32 32, %s21
          %s870 = ssub.s32 4096, 4096
          %871 = vsyncadd %s861, %s870
          %s872 = smul.addr %s868, 2
          %s873 = smul.addr %s872, 64
          %s874 = scalar_lea.hbm %s3, %s873
          %s875 = sshll.u32 %s864, 4
          %s876 = int_to_ptr.vmem [resolvable:$true] %s875
          %881 = dma.vmem_to_hbm [thread:$0]  %s876, 4096, %s874, %s861, 128, 128, 8
        $region44: #{tpu_custom_call.1} parent=31 // pred_fallthru
          _
      $region32: #{tpu_custom_call.1} parent=5 // pred_fallthru
        _
      %p882 = scmp.le.s32.totalorder 2, %s16
      // Predicated region
      $region45: #{tpu_custom_call.1} parent=5 // pred_check
        %p883 = pneg %p882
      $region46: #{tpu_custom_call.1} parent=5 // pred_check_branch
        %885 = sbr.rel (%p883) target = $region48
      $region47: #{tpu_custom_call.1} parent=5 // pred_region
        %s886 = ssub.s32 %s16, 2
        // Predicated region
        $region49: #{tpu_custom_call.1} parent=47 // pred_check
          %p887 = pneg %p113
        $region50: #{tpu_custom_call.1} parent=47 // pred_check_branch
          %889 = sbr.rel (%p887) target = $region52
        $region51: #{tpu_custom_call.1} parent=47 // pred_region
          %s890 = sand.u32 %s98, 1
          %s891 = scalar_lea.sflag [#allocation4], %s890
          %s892 = sand.u32 %s98, 1
          %s893 = smul.addr %s892, 256
          %s894 = scalar_lea.vmem [#allocation7], %s893
          %895 = dma.done %s891, 4096
        $region52: #{tpu_custom_call.1} parent=47 // pred_fallthru
          _
      $region48: #{tpu_custom_call.1} parent=5 // pred_fallthru
        _
    $region6: #{tpu_custom_call.1} parent=1 // loop_footer
      %s20 = sadd.s32 1, %s16
    $region7: #{tpu_custom_call.1} parent=1 // loop_footer_branch
      %15 = sbr.rel target = $region3
    $region8: #{tpu_custom_call.1} parent=1 // loop_exit
      _
    %896 = vsyncpa [#allocation3], 1
    %s897 = scalar_lea.sflag [#allocation3], 1
    %898 = vsyncpa %s897, 1
    %899 = vsyncpa [#allocation6], 1
    %900 = vsyncpa [#allocation4], 1
    %s901 = scalar_lea.sflag [#allocation4], 1
    %902 = vsyncpa %s901, 1

</llo_original>
